<compile_context>
chip_gen: v6e
topology: v6e:2x2x1
jax: 0.10.0
libtpu: 0.0.40
codegen_flags: <defaults>
</compile_context>

<pallas_src>
import functools

import jax
import jax.numpy as jnp
from jax import lax
from jax.experimental import pallas as pl
from jax.experimental.pallas import tpu as pltpu


def _ce_rowloss_kernel(x_ref, t_ref, loss_ref, *, num_classes, epsilon,
                       n_rows, tile_n):
    # Logits tile, promoted to f32 for stable softmax arithmetic (works on
    # v5e which has no bf16 VALU; also lets callers pass bf16 logits).
    x = x_ref[...].astype(jnp.float32)                      # (tile_n, C)

    # Stable log-sum-exp along the class (lane) axis.
    m = jnp.max(x, axis=1, keepdims=True)                   # (tile_n, 1)
    lse = m + jnp.log(jnp.sum(jnp.exp(x - m), axis=1, keepdims=True))

    # Closed-form label-smoothed cross entropy:
    #   loss_i = lse_i - (1-eps)*x[i, t_i] - (eps/C) * sum_j x[i, j]
    t = t_ref[...]                                          # (tile_n, 1) int32
    class_ids = lax.broadcasted_iota(jnp.int32, x.shape, 1)  # (tile_n, C)
    x_t = jnp.sum(jnp.where(class_ids == t, x, 0.0), axis=1, keepdims=True)
    sum_x = jnp.sum(x, axis=1, keepdims=True)

    loss = lse - (1.0 - epsilon) * x_t - (epsilon / num_classes) * sum_x

    # Mask rows past the true batch size (ragged last tile reads undefined
    # padding; keep those rows out of the sum).
    row_ids = (pl.program_id(0) * tile_n
               + lax.broadcasted_iota(jnp.int32, loss.shape, 0))
    loss_ref[...] = jnp.where(row_ids < n_rows, loss, 0.0)


def _round_up(x, m):
    return (x + m - 1) // m * m


def cross_entropy_loss(inputs, targets, *, num_classes, epsilon=0.1,
                       label_smooth=True, tile_n=None):
    """inputs: (N, C) float logits; targets: (N,) int class indices."""
    eps = float(epsilon) if label_smooth else 0.0
    n, c = inputs.shape
    assert c == num_classes

    if tile_n is None:
        # ~8 MiB of logits per input buffer => ~16 MiB double-buffered,
        # which fits comfortably on every generation (v7x has 64 MiB VMEM).
        itemsize = jnp.dtype(inputs.dtype).itemsize
        rows = (8 << 20) // max(1, c * itemsize)
        rows = max(8, (rows // 8) * 8)
        tile_n = min(rows, _round_up(n, 8))
    tile_n = max(8, (tile_n // 8) * 8)

    grid = (pl.cdiv(n, tile_n),)
    t2d = targets.astype(jnp.int32).reshape(n, 1)

    kernel = functools.partial(
        _ce_rowloss_kernel, num_classes=num_classes, epsilon=eps,
        n_rows=n, tile_n=tile_n)

    per_row = pl.pallas_call(
        kernel,
        out_shape=jax.ShapeDtypeStruct((n, 1), jnp.float32),
        grid=grid,
        in_specs=[
            pl.BlockSpec((tile_n, c), lambda i: (i, 0)),
            pl.BlockSpec((tile_n, 1), lambda i: (i, 0)),
        ],
        out_specs=pl.BlockSpec((tile_n, 1), lambda i: (i, 0)),
        compiler_params=pltpu.CompilerParams(
            dimension_semantics=("parallel",),
            vmem_limit_bytes=48 << 20),
    )(inputs, t2d)

    # (-smoothed * log_probs).mean(0).sum() == sum(per-row losses) / N
    # TODO(synk): very large C (>= ~16k) would want an inner class-tile grid
    # axis with online-softmax accumulation; not needed at these sizes.
    inv_n = jnp.float32(1.0 / n)
    return jnp.sum(per_row) * inv_n


def _reference(inputs, targets, *, num_classes, epsilon=0.1, label_smooth=True):
    eps = epsilon if label_smooth else 0.0
    log_probs = jax.nn.log_softmax(inputs.astype(jnp.float32), axis=1)
    one_hot = jax.nn.one_hot(targets, num_classes, dtype=jnp.float32)
    smoothed = (1.0 - eps) * one_hot + eps / num_classes
    return (-smoothed * log_probs).mean(0).sum()


if __name__ == "__main__":
    num_classes = 32
    batch = 19          # deliberately not a multiple of the tile -> ragged tile

    key = jax.random.PRNGKey(0)
    k_x, k_t = jax.random.split(key)
    x = jax.random.normal(k_x, (batch, num_classes), dtype=jnp.float32)
    t = jax.random.randint(k_t, (batch,), 0, num_classes, dtype=jnp.int32)

    # tile_n=8 so the small demo still exercises multi-tile + row masking.
    loss = cross_entropy_loss(x, t, num_classes=num_classes, epsilon=0.1,
                              label_smooth=True, tile_n=8)
    loss = jax.block_until_ready(loss)

    ref = _reference(x, t, num_classes=num_classes, epsilon=0.1,
                     label_smooth=True)
    assert jnp.allclose(loss, ref, atol=1e-5, rtol=1e-5), (loss, ref)

    print("KERNEL_OK")
</pallas_src>

<mosaic_0001>
module attributes {stable_mosaic.version = 11 : i64} {
  func.func @_ce_rowloss_kernel(%arg0: i32, %arg1: memref<8x32xf32, #tpu.memory_space<vmem>>, %arg2: memref<8x1xi32, #tpu.memory_space<vmem>>, %arg3: memref<8x1xf32, #tpu.memory_space<vmem>>) attributes {dimension_semantics = [#tpu.dimension_semantics<parallel>], iteration_bounds = array<i64: 3>, scalar_prefetch = 0 : i64, scratch_operands = 0 : i64, tpu.core_type = #tpu.core_type<tc>, window_params = [{transform_indices = @transform_0, window_bounds = array<i64: 8, 32>}, {transform_indices = @transform_1, window_bounds = array<i64: 8, 1>}, {transform_indices = @transform_2, window_bounds = array<i64: 8, 1>}]} {
    %c0 = arith.constant 0 : index
    %c0_0 = arith.constant 0 : index
    %0 = vector.load %arg1[%c0, %c0_0] : memref<8x32xf32, #tpu.memory_space<vmem>>, vector<8x32xf32>
    %cst = arith.constant dense<0xFF800000> : vector<8xf32>
    %1 = vector.multi_reduction <maximumf>, %0, %cst [1] : vector<8x32xf32> to vector<8xf32>
    %2 = vector.shape_cast %1 : vector<8xf32> to vector<8x1xf32>
    %3 = vector.broadcast %2 : vector<8x1xf32> to vector<8x32xf32>
    %4 = arith.subf %0, %3 : vector<8x32xf32>
    %5 = math.exp %4 : vector<8x32xf32>
    %cst_1 = arith.constant dense<0.000000e+00> : vector<8xf32>
    %6 = vector.multi_reduction <add>, %5, %cst_1 [1] : vector<8x32xf32> to vector<8xf32>
    %7 = vector.shape_cast %6 : vector<8xf32> to vector<8x1xf32>
    %8 = math.log %7 : vector<8x1xf32>
    %9 = arith.addf %2, %8 : vector<8x1xf32>
    %c0_2 = arith.constant 0 : index
    %c0_3 = arith.constant 0 : index
    %10 = vector.load %arg2[%c0_2, %c0_3] : memref<8x1xi32, #tpu.memory_space<vmem>>, vector<8x1xi32>
    %11 = tpu.iota {dimensions = array<i32: 1>} : vector<8x32xi32>
    %12 = vector.broadcast %10 : vector<8x1xi32> to vector<8x32xi32>
    %13 = arith.cmpi eq, %11, %12 : vector<8x32xi32>
    %cst_4 = arith.constant 0.000000e+00 : f32
    %14 = vector.broadcast %cst_4 : f32 to vector<8x32xf32>
    %15 = arith.select %13, %0, %14 : vector<8x32xi1>, vector<8x32xf32>
    %cst_5 = arith.constant dense<0.000000e+00> : vector<8xf32>
    %16 = vector.multi_reduction <add>, %15, %cst_5 [1] : vector<8x32xf32> to vector<8xf32>
    %17 = vector.shape_cast %16 : vector<8xf32> to vector<8x1xf32>
    %cst_6 = arith.constant dense<0.000000e+00> : vector<8xf32>
    %18 = vector.multi_reduction <add>, %0, %cst_6 [1] : vector<8x32xf32> to vector<8xf32>
    %19 = vector.shape_cast %18 : vector<8xf32> to vector<8x1xf32>
    %cst_7 = arith.constant 0.899999976 : f32
    %20 = vector.broadcast %cst_7 : f32 to vector<8x1xf32>
    %21 = arith.mulf %20, %17 : vector<8x1xf32>
    %22 = arith.subf %9, %21 : vector<8x1xf32>
    %cst_8 = arith.constant 3.125000e-03 : f32
    %23 = vector.broadcast %cst_8 : f32 to vector<8x1xf32>
    %24 = arith.mulf %23, %19 : vector<8x1xf32>
    %25 = arith.subf %22, %24 : vector<8x1xf32>
    %c8_i32 = arith.constant 8 : i32
    %26 = arith.muli %arg0, %c8_i32 : i32
    %27 = tpu.iota {dimensions = array<i32: 0>} : vector<8x1xi32>
    %28 = vector.broadcast %26 : i32 to vector<8x1xi32>
    %29 = arith.addi %28, %27 : vector<8x1xi32>
    %c19_i32 = arith.constant 19 : i32
    %30 = vector.broadcast %c19_i32 : i32 to vector<8x1xi32>
    %31 = arith.cmpi slt, %29, %30 : vector<8x1xi32>
    %cst_9 = arith.constant 0.000000e+00 : f32
    %32 = vector.broadcast %cst_9 : f32 to vector<8x1xf32>
    %33 = arith.select %31, %25, %32 : vector<8x1xi1>, vector<8x1xf32>
    %c0_10 = arith.constant 0 : index
    %c0_11 = arith.constant 0 : index
    %34 = vector.load %arg3[%c0_10, %c0_11] : memref<8x1xf32, #tpu.memory_space<vmem>>, vector<8x1xf32>
    tpu.vector_store %arg3[%c0_10, %c0_11], %33 {strides = array<i32>} : memref<8x1xf32, #tpu.memory_space<vmem>>, vector<8x1xf32>,
    return
  }
  func.func @transform_0(%arg0: i32) -> (i32, i32) {
    %c0_i32 = arith.constant 0 : i32
    %c0_i32_0 = arith.constant 0 : i32
    return %arg0, %c0_i32 : i32, i32
  }
  func.func @transform_1(%arg0: i32) -> (i32, i32) {
    %c0_i32 = arith.constant 0 : i32
    %c0_i32_0 = arith.constant 0 : i32
    return %arg0, %c0_i32 : i32, i32
  }
  func.func @transform_2(%arg0: i32) -> (i32, i32) {
    %c0_i32 = arith.constant 0 : i32
    %c0_i32_0 = arith.constant 0 : i32
    return %arg0, %c0_i32 : i32, i32
  }
}

</mosaic_0001>

<llo_original>
// kernel: tpu_custom_call.1
$region0: #{tpu_custom_call.1}
  #allocation0 [shape = 'u32[]', space=smem, size = 0x4, offset = 0x4, fixed_abs, tag = 'smem constant byte address 0x4 - core index']
  #allocation1 [shape = 'u32[144,128]{1,0:T(1,128)}', space=vmem, size = 0x12000, scoped, tag = 'internal scratch']
  %s0 = inlined_call_operand.vmem [shape: f32[19,32], index: 0, kind: input, shape index: {}]
  %s1 = inlined_call_operand.vmem [shape: s32[19,1], index: 1, kind: input, shape index: {}]
  %s2 = inlined_call_operand.vmem [shape: f32[19,1], index: 2, kind: output, shape index: {}]
  %s3 = sld [smem:[#allocation0]]
  $region41: #{tpu_custom_call.1} parent=0
    _
  %s5 = ssub.s32 1, %s3
  %s6 = scalar_select 0, %s5, %s3
  loop: start=0, step=1, limit=5
  $region2: #{tpu_custom_call.1} parent=0 // loop_pre_header
    _
  $region3: #{tpu_custom_call.1} parent=0 // loop_header
    %s8 = sphi 0, %s12
    %p9 = scmp.ge.s32.totalorder %s8, 5
    %s18 = sphi 0, %s20
    %s21 = sphi 0, %s18
    %s22 = sphi 0, %s21
    %s38 = sphi 0, %s22
    %s44 = sphi 0, %s46
    %s47 = sphi 0, %s44
    %s48 = sphi 0, %s47
    %s64 = sphi 0, %s48
    %s70 = sphi 0, %s72
    %s73 = sphi 0, %s70
    %s74 = sphi 0, %s73
    %s90 = sphi 0, %s74
  $region4: #{tpu_custom_call.1} parent=0 // loop_header_branch
    %11 = sbr.rel (%p9) target = $region8
  $region5: #{tpu_custom_call.1} parent=0 // loop_body
    %s13 = ssub.s32 %s8, 1
    %s14 = ssub.s32 %s8, 2
    %s15 = sadd.s32 %s8, 1
    %s16 = ssub.s32 %s8, %s15
    %p17 = scmp.eq.s32.totalorder %s16, 0
    %s19 = sadd.s32 %s18, 1
    %s20 = scalar_select %p17, %s18, %s19
    %p23 = pneg %p17
    %p24 = scmp.eq.s32.totalorder %s8, 2
    %p25 = por %p23, %p24
    %p26 = scmp.ne.s32.totalorder %s18, %s21
    %p27 = scmp.eq.s32.totalorder %s8, 0
    %p28 = por %p26, %p27
    %p29 = scmp.ne.s32.totalorder %s18, %s21
    %p30 = scmp.eq.s32.totalorder %s13, 2
    %p31 = por %p29, %p30
    %p32 = scmp.ne.s32.totalorder %s21, %s22
    %p33 = scmp.eq.s32.totalorder %s13, 0
    %p34 = por %p32, %p33
    %p35 = scmp.ne.s32.totalorder %s21, %s22
    %p36 = scmp.eq.s32.totalorder %s14, 2
    %p37 = por %p35, %p36
    %p39 = scmp.ne.s32.totalorder %s22, %s38
    %p40 = scmp.eq.s32.totalorder %s14, 0
    %p41 = por %p39, %p40
    %s42 = ssub.s32 %s8, %s15
    %p43 = scmp.eq.s32.totalorder %s42, 0
    %s45 = sadd.s32 %s44, 1
    %s46 = scalar_select %p43, %s44, %s45
    %p49 = pneg %p43
    %p50 = scmp.eq.s32.totalorder %s8, 2
    %p51 = por %p49, %p50
    %p52 = scmp.ne.s32.totalorder %s44, %s47
    %p53 = scmp.eq.s32.totalorder %s8, 0
    %p54 = por %p52, %p53
    %p55 = scmp.ne.s32.totalorder %s44, %s47
    %p56 = scmp.eq.s32.totalorder %s13, 2
    %p57 = por %p55, %p56
    %p58 = scmp.ne.s32.totalorder %s47, %s48
    %p59 = scmp.eq.s32.totalorder %s13, 0
    %p60 = por %p58, %p59
    %p61 = scmp.ne.s32.totalorder %s47, %s48
    %p62 = scmp.eq.s32.totalorder %s14, 2
    %p63 = por %p61, %p62
    %p65 = scmp.ne.s32.totalorder %s48, %s64
    %p66 = scmp.eq.s32.totalorder %s14, 0
    %p67 = por %p65, %p66
    %s68 = ssub.s32 %s8, %s15
    %p69 = scmp.eq.s32.totalorder %s68, 0
    %s71 = sadd.s32 %s70, 1
    %s72 = scalar_select %p69, %s70, %s71
    %p75 = pneg %p69
    %p76 = scmp.eq.s32.totalorder %s8, 2
    %p77 = por %p75, %p76
    %p78 = scmp.ne.s32.totalorder %s70, %s73
    %p79 = scmp.eq.s32.totalorder %s8, 0
    %p80 = por %p78, %p79
    %p81 = scmp.ne.s32.totalorder %s70, %s73
    %p82 = scmp.eq.s32.totalorder %s13, 2
    %p83 = por %p81, %p82
    %p84 = scmp.ne.s32.totalorder %s73, %s74
    %p85 = scmp.eq.s32.totalorder %s13, 0
    %p86 = por %p84, %p85
    %p87 = scmp.ne.s32.totalorder %s73, %s74
    %p88 = scmp.eq.s32.totalorder %s14, 2
    %p89 = por %p87, %p88
    %p91 = scmp.ne.s32.totalorder %s74, %s90
    %p92 = scmp.eq.s32.totalorder %s14, 0
    %p93 = por %p91, %p92
    %p94 = scmp.le.s32.totalorder 1, %s8
    %p95 = scmp.lt.s32.totalorder %s8, 4
    %p96 = pnand %p94, %p95
    %p97 = pneg %p96
    // Predicated region
    $region9: #{tpu_custom_call.1} parent=5 // pred_check
      _
    $region10: #{tpu_custom_call.1} parent=5 // pred_check_branch
      %99 = sbr.rel (%p96) target = $region12
    $region11: #{tpu_custom_call.1} parent=5 // pred_region
      %s100 = ssub.s32 %s8, 1
    $region12: #{tpu_custom_call.1} parent=5 // pred_fallthru
      _
    %p101 = scmp.lt.s32.totalorder %s8, 3
    // Predicated region
    $region13: #{tpu_custom_call.1} parent=5 // pred_check
      %p102 = pneg %p101
    $region14: #{tpu_custom_call.1} parent=5 // pred_check_branch
      %104 = sbr.rel (%p102) target = $region16
    $region15: #{tpu_custom_call.1} parent=5 // pred_region
      // Predicated region
      $region17: #{tpu_custom_call.1} parent=15 // pred_check
        %p105 = pneg %p28
      $region18: #{tpu_custom_call.1} parent=15 // pred_check_branch
        %107 = sbr.rel (%p105) target = $region20
      $region19: #{tpu_custom_call.1} parent=15 // pred_region
        %p108 = scmp.lt.s32.totalorder %s8, 2
        %s109 = scalar_select %p108, %s8, 2
        %s110 = smul.addr %s109, 8
        %s111 = scalar_lea.vmem %s0, %s110
      $region20: #{tpu_custom_call.1} parent=15 // pred_fallthru
        _
      // Predicated region
      $region21: #{tpu_custom_call.1} parent=15 // pred_check
        %p112 = pneg %p54
      $region22: #{tpu_custom_call.1} parent=15 // pred_check_branch
        %114 = sbr.rel (%p112) target = $region24
      $region23: #{tpu_custom_call.1} parent=15 // pred_region
        %p115 = scmp.lt.s32.totalorder %s8, 2
        %s116 = scalar_select %p115, %s8, 2
        %s117 = smul.addr %s116, 8
        %s118 = scalar_lea.vmem %s1, %s117
      $region24: #{tpu_custom_call.1} parent=15 // pred_fallthru
        _
    $region16: #{tpu_custom_call.1} parent=5 // pred_fallthru
      _
    %p119 = scmp.le.s32.totalorder 1, %s8
    %p120 = scmp.lt.s32.totalorder %s8, 4
    %p121 = pnand %p119, %p120
    %p122 = pneg %p121
    // Predicated region
    $region25: #{tpu_custom_call.1} parent=5 // pred_check
      _
    $region26: #{tpu_custom_call.1} parent=5 // pred_check_branch
      %124 = sbr.rel (%p121) target = $region28
    $region27: #{tpu_custom_call.1} parent=5 // pred_region
      %s125 = ssub.s32 %s8, 1
      %p126 = scmp.lt.s32.totalorder %s13, 2
      %s127 = scalar_select %p126, %s13, 2
      %s128 = smul.addr %s127, 8
      %s129 = scalar_lea.vmem %s0, %s128
      %p130 = pneg %p34
      %p131 = pneg %p31
      %p132 = scmp.lt.s32.totalorder %s13, 2
      %s133 = scalar_select %p132, %s13, 2
      %s134 = smul.addr %s133, 8
      %s135 = scalar_lea.vmem %s1, %s134
      %p136 = pneg %p60
      %p137 = pneg %p57
      %p138 = pneg %p86
      %p139 = pneg %p83
      %p140 = scmp.lt.s32.totalorder %s13, 2
      %s141 = scalar_select %p140, %s13, 2
      %s142 = smul.addr %s141, 8
      %s143 = scalar_lea.vmem %s2, %s142
      %p144 = scmp.lt.s32.totalorder %s13, 2
      %s145 = scalar_select %p144, %s13, 2
      %s146 = smul.addr %s145, 8
      %s147 = scalar_lea.vmem %s0, %s146
      %p148 = scmp.lt.s32.totalorder %s13, 2
      %s149 = scalar_select %p148, %s13, 2
      %s150 = smul.addr %s149, 8
      %s151 = scalar_lea.vmem %s1, %s150
      %p152 = scmp.lt.s32.totalorder %s13, 2
      %s153 = scalar_select %p152, %s13, 2
      %s154 = smul.addr %s153, 8
      %s155 = scalar_lea.vmem %s2, %s154
      %v156 = vld [vmem:[%s147] sm:$0xff]
      %vm157 = vcmask 261120
      %v158 = vsel %vm157, %v156, -inf
      %159 = vmax.xlane.f32.xlu0 %v158
      %v160 = vpop.xlane.xlu0 %159
      %v161 = vsub.f32 %v156, %v160
      %v162 = vmul.f32 %v161, 1.442695
      %v163 = vpow.pop %v162
      %v164 = vsel %vm157, %v163, 0.0
      %165 = vadd.xlane.f32.xlu0 %v164
      %v166 = vpop.xlane.xlu0 %165
      %v167 = vlog2.pop %v166
      %v168 = vmul.f32 %v167, 0.6931472
      %v169 = vadd.f32 %v160, %v168
      %v170 = vld [vmem:[%s151] sm:$0xff]
      %v171 = vlaneseq
      %v172 = vand.u32 %v171, 127
      %173 = vset.pattern.permute.xlu0 0
      %174 = vperm.xlu0 %173, %v170
      %v175 = vpop.permute.xlu0 %174
      %vm176 = vcmp.eq.s32.totalorder %v172, %v175
      %v177 = vsel %vm176, %v156, 0.0
      %v178 = vsel %vm157, %v177, 0.0
      %179 = vadd.xlane.f32.xlu0 %v178
      %v180 = vpop.xlane.xlu0 %179
      %v181 = vsel %vm157, %v156, 0.0
      %182 = vadd.xlane.f32.xlu0 %v181
      %v183 = vpop.xlane.xlu0 %182
      %v184 = vmul.f32 %v180, 0.9
      %v185 = vsub.f32 %v169, %v184
      %v186 = vmul.f32 %v183, 0.003125
      %v187 = vsub.f32 %v185, %v186
      %s188 = smul.u32 %s13, 8
      %v189 = vlaneseq
      %v190 = vshrl.u32 %v189, 7
      %v191 = vstv %s188
      %v192 = vadd.s32 %v191, %v190
      %vm193 = vcmp.lt.s32.totalorder %v192, 19
      %v194 = vsel %vm193, %v187, 0.0
      %vm195 = vcmask 7168
      %196 = vst.msk [vmem:[%s155] sm:$0xff] %vm195, %v194
      %p197 = scmp.lt.s32.totalorder %s13, 2
      %s198 = scalar_select %p197, %s13, 2
      %s199 = smul.addr %s198, 8
      %s200 = scalar_lea.vmem %s2, %s199
      // Predicated region
      $region29: #{tpu_custom_call.1} parent=27 // pred_check
        %p201 = pneg %p83
      $region30: #{tpu_custom_call.1} parent=27 // pred_check_branch
        %203 = sbr.rel (%p201) target = $region32
      $region31: #{tpu_custom_call.1} parent=27 // pred_region
        _
      $region32: #{tpu_custom_call.1} parent=27 // pred_fallthru
        _
    $region28: #{tpu_custom_call.1} parent=5 // pred_fallthru
      _
    %p204 = scmp.le.s32.totalorder 2, %s8
    // Predicated region
    $region33: #{tpu_custom_call.1} parent=5 // pred_check
      %p205 = pneg %p204
    $region34: #{tpu_custom_call.1} parent=5 // pred_check_branch
      %207 = sbr.rel (%p205) target = $region36
    $region35: #{tpu_custom_call.1} parent=5 // pred_region
      %s208 = ssub.s32 %s8, 2
      // Predicated region
      $region37: #{tpu_custom_call.1} parent=35 // pred_check
        %p209 = pneg %p89
      $region38: #{tpu_custom_call.1} parent=35 // pred_check_branch
        %211 = sbr.rel (%p209) target = $region40
      $region39: #{tpu_custom_call.1} parent=35 // pred_region
        %p212 = scmp.lt.s32.totalorder %s14, 2
        %s213 = scalar_select %p212, %s14, 2
        %s214 = smul.addr %s213, 8
        %s215 = scalar_lea.vmem %s2, %s214
      $region40: #{tpu_custom_call.1} parent=35 // pred_fallthru
        _
    $region36: #{tpu_custom_call.1} parent=5 // pred_fallthru
      _
  $region6: #{tpu_custom_call.1} parent=0 // loop_footer
    %s12 = sadd.s32 1, %s8
  $region7: #{tpu_custom_call.1} parent=0 // loop_footer_branch
    %7 = sbr.rel target = $region3
  $region8: #{tpu_custom_call.1} parent=0 // loop_exit
    _

</llo_original>
